<compile_context>
chip_gen: v5e
topology: v5e:2x2
jax: 0.10.0
libtpu: 0.0.40
codegen_flags: <defaults>
</compile_context>

<pallas_src>
import numpy as np
import jax
import jax.numpy as jnp
from jax.experimental import pallas as pl
from jax.experimental.pallas import tpu as pltpu


def _gelu_tanh(x):
    # tanh-approximate GELU, computed in f32 (tanh goes to the EUP).
    # TODO(synk): torch F.gelu defaults to the exact erf form; the tanh approximation
    # is used here for guaranteed Mosaic lowering (difference ~1e-3 absolute).
    c = 0.7978845608028654  # sqrt(2/pi)
    return 0.5 * x * (1.0 + jnp.tanh(c * (x + 0.044715 * x * x * x)))


def classifier_kernel(x_ref, w1t_ref, b1_ref, w2t_ref, b2_ref, mask_ref, out_ref):
    """One row-tile of the fused classifier1 -> GELU -> classifier2 pipeline.

    x_ref    : (1, TR, H)  bf16  flattened (token, label) rows of input features
    w1t_ref  : (H, H)      bf16  classifier1 weight, pre-transposed to (in, out)
    b1_ref   : (1, H)      f32   classifier1 bias
    w2t_ref  : (H, L)      bf16  Classifier_Layer weight, pre-transposed to (H, L)
    b2_ref   : (1, L)      f32   Classifier_Layer bias
    mask_ref : (TR, L)     f32   static one-hot row->label selector (row r -> label r % L)
    out_ref  : (1, 1, TR)  f32   lane-dense flattened (token, label) logits
    """
    x = x_ref[0]                                            # (TR, H) bf16

    # classifier1: one MXU matmul (bf16 operands, f32 accumulation); bias + GELU in f32.
    h = jnp.dot(x, w1t_ref[...], preferred_element_type=jnp.float32) + b1_ref[...]
    h = _gelu_tanh(h)                                       # dropout == identity (eval)

    # classifier2 (per-label weighted sum over H) as a second, skinny MXU matmul:
    #   m[r, c] = sum_h h[r, h] * W2[c, h].  Row r belongs to label (r % L), so the
    #   wanted logit is the "diagonal" entry m[r, r % L].  Select it (and fold in the
    #   per-label bias) with the static one-hot mask and a tiny L-lane reduce.
    m = jnp.dot(h.astype(jnp.bfloat16), w2t_ref[...],
                preferred_element_type=jnp.float32)         # (TR, L)
    out = jnp.sum((m + b2_ref[...]) * mask_ref[...], axis=-1)   # (TR,)

    out_ref[0, 0] = out.astype(out_ref.dtype)


def _vmem_capacity_bytes():
    try:
        return int(pltpu.get_tpu_info().vmem_capacity_bytes)
    except Exception:
        return 64 * 1024 * 1024     # conservative fallback (v7x per-core VMEM)


def _choose_row_tile(tokens, L, H, vmem_budget_bytes):
    """Largest (token, label)-row tile fitting the VMEM budget.

    Rows are flattened (token, label) pairs; a tile of TR rows must hold whole tokens
    (TR % L == 0) and divide the total row count so the grid is exact.
    """
    # Per-row VMEM bytes: bf16 x tile (double-buffered), f32 GELU intermediate,
    # bf16 recast for the 2nd matmul, small (TR, L) / output temporaries.
    per_row = 2 * (2 * H) + 4 * H + 2 * H + 8 * L + 32
    # Tile-invariant blocks (default double-buffered) + slack for compiler scratch.
    fixed = 2 * (H * H * 2 + H * L * 2 + H * 4 + L * 4) + (64 << 10)
    avail = max(vmem_budget_bytes - fixed, per_row * L)
    cap_rows = min(max(avail // per_row, L), 8192)

    best = L
    for d in range(1, tokens + 1):
        if tokens % d:
            continue
        tr = L * d
        if best < tr <= cap_rows:
            best = tr
    return best


def pack_params(params):
    """One-time parameter packing (hoists the W1 transpose / casts off the hot path)."""
    H = params["w1"].shape[0]
    L = params["w2"].shape[0]
    return {
        "w1t": jnp.asarray(params["w1"]).T.astype(jnp.bfloat16),   # (H, H)  (in, out)
        "b1":  jnp.asarray(params["b1"]).reshape(1, H).astype(jnp.float32),
        "w2t": jnp.asarray(params["w2"]).T.astype(jnp.bfloat16),   # (H, L)
        "b2":  jnp.asarray(params["b2"]).reshape(1, L).astype(jnp.float32),
    }


def multi_nonlinear_classifier(input_features, packed_params, *, row_tile=None):
    """Forward pass of MultiNonLinearClassifierForMultiLabel (eval mode)."""
    B, S, L, H = input_features.shape
    assert packed_params["w1t"].shape == (H, H)
    assert packed_params["w2t"].shape == (H, L)
    n_rows = B * S * L

    vmem_cap = _vmem_capacity_bytes()
    if row_tile is None:
        row_tile = _choose_row_tile(B * S, L, H, vmem_cap // 2)
    TR = int(row_tile)
    assert n_rows % TR == 0 and TR % L == 0, "row_tile must divide B*S*L and be a multiple of L"
    num_tiles = n_rows // TR

    # Lane-dense, HBM-contiguous layouts on both sides of the kernel (free reshapes).
    # bf16 matmul operands; if the upstream producer already emits bf16 this cast is a no-op.
    x_rows = input_features.reshape(num_tiles, TR, H).astype(jnp.bfloat16)

    # Static row -> label one-hot selector (TR % L == 0, so it is tile-invariant).
    mask = jnp.asarray(
        (np.arange(TR)[:, None] % L == np.arange(L)[None, :]).astype(np.float32))

    out_flat = pl.pallas_call(
        classifier_kernel,
        out_shape=jax.ShapeDtypeStruct((num_tiles, 1, TR), jnp.float32),
        grid_spec=pltpu.PrefetchScalarGridSpec(
            num_scalar_prefetch=0,
            grid=(num_tiles,),
            in_specs=[
                pl.BlockSpec((1, TR, H), lambda i: (i, 0, 0)),
                # Constant-index parameter blocks (DMA'd once per launch).
                # TODO(synk): pipeline_mode=pl.Buffered(1) would single-buffer these and
                # free ~2*H*H bytes of VMEM headroom on v7x; kept default for portability.
                pl.BlockSpec((H, H), lambda i: (0, 0)),
                pl.BlockSpec((1, H), lambda i: (0, 0)),
                pl.BlockSpec((H, L), lambda i: (0, 0)),
                pl.BlockSpec((1, L), lambda i: (0, 0)),
                pl.BlockSpec((TR, L), lambda i: (0, 0)),
            ],
            out_specs=pl.BlockSpec((1, 1, TR), lambda i: (i, 0, 0)),
        ),
        compiler_params=pltpu.CompilerParams(
            dimension_semantics=("parallel",),
            vmem_limit_bytes=min(int(vmem_cap * 0.8), 100 * 1024 * 1024),
        ),
    )(x_rows, packed_params["w1t"], packed_params["b1"],
      packed_params["w2t"], packed_params["b2"], mask)

    return out_flat.reshape(B, S, L)


def _round_bf16(x):
    return x.astype(jnp.bfloat16).astype(jnp.float32)


def reference_forward(input_features, params, *, match_kernel_bf16=True):
    """Pure-JAX reference mirroring the PyTorch forward (eval mode).

    With match_kernel_bf16=True the matmul operands are rounded to bf16 exactly like
    the kernel does (accumulation stays f32)."""
    w1t = params["w1"].T.astype(jnp.float32)
    x = input_features.astype(jnp.float32)
    if match_kernel_bf16:
        x, w1t = _round_bf16(x), _round_bf16(w1t)
    h = jnp.einsum("bslh,hk->bslk", x, w1t) + params["b1"]
    h = _gelu_tanh(h)
    w2 = params["w2"].astype(jnp.float32)
    if match_kernel_bf16:
        h, w2 = _round_bf16(h), _round_bf16(w2)
    # dropout: identity at inference
    out = jnp.einsum("bslh,lh->bsl", h, w2) + params["b2"]
    return out


def init_params(key, hidden_size, num_label):
    """Deterministic synthetic parameters matching the nn module shapes."""
    H, L = hidden_size, num_label
    ks = jax.random.split(key, 4)
    scale = 0.1
    return {
        "w1": scale * jax.random.normal(ks[0], (H, H), jnp.float32),  # classifier1.weight
        "b1": scale * jax.random.normal(ks[1], (H,), jnp.float32),    # classifier1.bias
        "w2": scale * jax.random.normal(ks[2], (L, H), jnp.float32),  # classifier2.weight
        "b2": scale * jax.random.normal(ks[3], (L,), jnp.float32),    # classifier2.bias
    }


if __name__ == "__main__":
    B, S, L, H = 2, 8, 4, 32   # batch, seq, num_label, hidden

    key = jax.random.PRNGKey(0)
    k_x, k_p = jax.random.split(key)
    input_features = jax.random.normal(k_x, (B, S, L, H), jnp.float32)
    params = init_params(k_p, H, L)
    packed = pack_params(params)   # one-time packing (transpose / bf16 casts hoisted)

    out = multi_nonlinear_classifier(input_features, packed)
    out = jax.block_until_ready(out)
    assert out.shape == (B, S, L)

    ref_bf16 = reference_forward(input_features, params, match_kernel_bf16=True)
    ref_f32 = reference_forward(input_features, params, match_kernel_bf16=False)
    assert jnp.allclose(out, ref_bf16, atol=2e-3, rtol=2e-3), "mismatch vs bf16-matched reference"
    assert jnp.allclose(out, ref_f32, atol=5e-2, rtol=5e-2), "mismatch vs f32 reference"

    print("KERNEL_OK")
</pallas_src>

<mosaic_0001>
module attributes {stable_mosaic.version = 11 : i64} {
  func.func @classifier_kernel(%arg0: i32, %arg1: memref<1x64x32xbf16, #tpu.memory_space<vmem>>, %arg2: memref<32x32xbf16, #tpu.memory_space<vmem>>, %arg3: memref<1x32xf32, #tpu.memory_space<vmem>>, %arg4: memref<32x4xbf16, #tpu.memory_space<vmem>>, %arg5: memref<1x4xf32, #tpu.memory_space<vmem>>, %arg6: memref<64x4xf32, #tpu.memory_space<vmem>>, %arg7: memref<1x1x64xf32, #tpu.memory_space<vmem>>) attributes {dimension_semantics = [#tpu.dimension_semantics<parallel>], iteration_bounds = array<i64: 1>, scalar_prefetch = 0 : i64, scratch_operands = 0 : i64, tpu.core_type = #tpu.core_type<tc>, window_params = [{transform_indices = @transform_0, window_bounds = array<i64: 1, 64, 32>}, {pipeline_mode = #tpu.pipeline_mode<synchronous>, transform_indices = @transform_1, window_bounds = array<i64: 32, 32>}, {pipeline_mode = #tpu.pipeline_mode<synchronous>, transform_indices = @transform_2, window_bounds = array<i64: 1, 32>}, {pipeline_mode = #tpu.pipeline_mode<synchronous>, transform_indices = @transform_3, window_bounds = array<i64: 32, 4>}, {pipeline_mode = #tpu.pipeline_mode<synchronous>, transform_indices = @transform_4, window_bounds = array<i64: 1, 4>}, {pipeline_mode = #tpu.pipeline_mode<synchronous>, transform_indices = @transform_5, window_bounds = array<i64: 64, 4>}, {transform_indices = @transform_6, window_bounds = array<i64: 1, 1, 64>}]} {
    %c0 = arith.constant 0 : index
    %c0_0 = arith.constant 0 : index
    %c0_1 = arith.constant 0 : index
    %0 = vector.load %arg1[%c0, %c0_0, %c0_1] : memref<1x64x32xbf16, #tpu.memory_space<vmem>>, vector<1x64x32xbf16>
    %1 = vector.shape_cast %0 : vector<1x64x32xbf16> to vector<64x32xbf16>
    %c0_2 = arith.constant 0 : index
    %c0_3 = arith.constant 0 : index
    %2 = vector.load %arg2[%c0_2, %c0_3] : memref<32x32xbf16, #tpu.memory_space<vmem>>, vector<32x32xbf16>
    %cst = arith.constant dense<0.000000e+00> : vector<64x32xf32>
    %3 = tpu.matmul %1, %2, %cst {dimension_numbers = #tpu.dot_dimension_numbers<[1], [0], [0], [1], [0, 0, 1, 1], [], []>} : vector<64x32xbf16>, vector<32x32xbf16>, vector<64x32xf32> -> vector<64x32xf32>
    %c0_4 = arith.constant 0 : index
    %c0_5 = arith.constant 0 : index
    %4 = vector.load %arg3[%c0_4, %c0_5] : memref<1x32xf32, #tpu.memory_space<vmem>>, vector<1x32xf32>
    %5 = vector.broadcast %4 : vector<1x32xf32> to vector<64x32xf32>
    %6 = arith.addf %3, %5 : vector<64x32xf32>
    %cst_6 = arith.constant 5.000000e-01 : f32
    %7 = vector.broadcast %cst_6 : f32 to vector<64x32xf32>
    %8 = arith.mulf %7, %6 : vector<64x32xf32>
    %cst_7 = arith.constant 4.471500e-02 : f32
    %9 = vector.broadcast %cst_7 : f32 to vector<64x32xf32>
    %10 = arith.mulf %9, %6 : vector<64x32xf32>
    %11 = arith.mulf %10, %6 : vector<64x32xf32>
    %12 = arith.mulf %11, %6 : vector<64x32xf32>
    %13 = arith.addf %6, %12 : vector<64x32xf32>
    %cst_8 = arith.constant 0.797884583 : f32
    %14 = vector.broadcast %cst_8 : f32 to vector<64x32xf32>
    %15 = arith.mulf %14, %13 : vector<64x32xf32>
    %16 = math.tanh %15 : vector<64x32xf32>
    %cst_9 = arith.constant 1.000000e+00 : f32
    %17 = vector.broadcast %cst_9 : f32 to vector<64x32xf32>
    %18 = arith.addf %17, %16 : vector<64x32xf32>
    %19 = arith.mulf %8, %18 : vector<64x32xf32>
    %20 = arith.truncf %19 : vector<64x32xf32> to vector<64x32xbf16>
    %c0_10 = arith.constant 0 : index
    %c0_11 = arith.constant 0 : index
    %21 = vector.load %arg4[%c0_10, %c0_11] : memref<32x4xbf16, #tpu.memory_space<vmem>>, vector<32x4xbf16>
    %cst_12 = arith.constant dense<0.000000e+00> : vector<64x4xf32>
    %22 = tpu.matmul %20, %21, %cst_12 {dimension_numbers = #tpu.dot_dimension_numbers<[1], [0], [0], [1], [0, 0, 1, 1], [], []>} : vector<64x32xbf16>, vector<32x4xbf16>, vector<64x4xf32> -> vector<64x4xf32>
    %c0_13 = arith.constant 0 : index
    %c0_14 = arith.constant 0 : index
    %23 = vector.load %arg5[%c0_13, %c0_14] : memref<1x4xf32, #tpu.memory_space<vmem>>, vector<1x4xf32>
    %24 = vector.broadcast %23 : vector<1x4xf32> to vector<64x4xf32>
    %25 = arith.addf %22, %24 : vector<64x4xf32>
    %c0_15 = arith.constant 0 : index
    %c0_16 = arith.constant 0 : index
    %26 = vector.load %arg6[%c0_15, %c0_16] : memref<64x4xf32, #tpu.memory_space<vmem>>, vector<64x4xf32>
    %27 = arith.mulf %25, %26 : vector<64x4xf32>
    %cst_17 = arith.constant dense<0.000000e+00> : vector<64xf32>
    %28 = vector.multi_reduction <add>, %27, %cst_17 [1] : vector<64x4xf32> to vector<64xf32>
    %c0_18 = arith.constant 0 : index
    %c0_19 = arith.constant 0 : index
    %c0_20 = arith.constant 0 : index
    %29 = vector.load %arg7[%c0_18, %c0_19, %c0_20] : memref<1x1x64xf32, #tpu.memory_space<vmem>>, vector<1x1x64xf32>
    %30 = vector.shape_cast %29 : vector<1x1x64xf32> to vector<64xf32>
    %31 = vector.shape_cast %28 : vector<64xf32> to vector<1x1x64xf32>
    tpu.vector_store %arg7[%c0_18, %c0_19, %c0_20], %31 {strides = array<i32>} : memref<1x1x64xf32, #tpu.memory_space<vmem>>, vector<1x1x64xf32>,
    return
  }
  func.func @transform_0(%arg0: i32) -> (i32, i32, i32) {
    %c0_i32 = arith.constant 0 : i32
    %c0_i32_0 = arith.constant 0 : i32
    %c0_i32_1 = arith.constant 0 : i32
    return %arg0, %c0_i32, %c0_i32_0 : i32, i32, i32
  }
  func.func @transform_1(%arg0: i32) -> (i32, i32) {
    %c0_i32 = arith.constant 0 : i32
    %c0_i32_0 = arith.constant 0 : i32
    %c0_i32_1 = arith.constant 0 : i32
    return %c0_i32, %c0_i32_0 : i32, i32
  }
  func.func @transform_2(%arg0: i32) -> (i32, i32) {
    %c0_i32 = arith.constant 0 : i32
    %c0_i32_0 = arith.constant 0 : i32
    %c0_i32_1 = arith.constant 0 : i32
    return %c0_i32, %c0_i32_0 : i32, i32
  }
  func.func @transform_3(%arg0: i32) -> (i32, i32) {
    %c0_i32 = arith.constant 0 : i32
    %c0_i32_0 = arith.constant 0 : i32
    %c0_i32_1 = arith.constant 0 : i32
    return %c0_i32, %c0_i32_0 : i32, i32
  }
  func.func @transform_4(%arg0: i32) -> (i32, i32) {
    %c0_i32 = arith.constant 0 : i32
    %c0_i32_0 = arith.constant 0 : i32
    %c0_i32_1 = arith.constant 0 : i32
    return %c0_i32, %c0_i32_0 : i32, i32
  }
  func.func @transform_5(%arg0: i32) -> (i32, i32) {
    %c0_i32 = arith.constant 0 : i32
    %c0_i32_0 = arith.constant 0 : i32
    %c0_i32_1 = arith.constant 0 : i32
    return %c0_i32, %c0_i32_0 : i32, i32
  }
  func.func @transform_6(%arg0: i32) -> (i32, i32, i32) {
    %c0_i32 = arith.constant 0 : i32
    %c0_i32_0 = arith.constant 0 : i32
    %c0_i32_1 = arith.constant 0 : i32
    return %arg0, %c0_i32, %c0_i32_0 : i32, i32, i32
  }
}

</mosaic_0001>

<llo_original>
// kernel: tpu_custom_call.1
$region0: #{tpu_custom_call.1}
  #allocation0 [shape = 'u32[]', space=smem, size = 0x4, offset = 0x4, fixed_abs, tag = 'smem constant byte address 0x4 - core index']
  #allocation1 [shape = 'u32[72,128]{1,0:T(1,128)}', space=vmem, size = 0x9000, scoped, tag = 'internal scratch']
  %s0 = inlined_call_operand.vmem [shape: bf16[1,64,32], index: 0, kind: input, shape index: {}]
  %s1 = inlined_call_operand.vmem [shape: bf16[32,32], index: 1, kind: input, shape index: {}]
  %s2 = inlined_call_operand.vmem [shape: f32[1,32], index: 2, kind: input, shape index: {}]
  %s3 = inlined_call_operand.vmem [shape: bf16[32,4], index: 3, kind: input, shape index: {}]
  %s4 = inlined_call_operand.vmem [shape: f32[1,4], index: 4, kind: input, shape index: {}]
  %s5 = inlined_call_operand.vmem [shape: f32[64,4], index: 5, kind: input, shape index: {}]
  %s6 = inlined_call_operand.hbm [shape: f32[1,1,64], index: 6, kind: output, shape index: {}]
  %s7 = sld [smem:[#allocation0]]
  $region34: #{tpu_custom_call.1} parent=0
    _
  %s9 = ssub.s32 1, %s7
  %s10 = scalar_select 0, %s9, %s7
  $region1: #{tpu_custom_call.1} parent=0
    #allocation2 [shape = 'u8[512]{0}', space=vmem, size = 0x400, scoped, tag = 'output window, operand 0, single buffered']
    #allocation3 [shape = 's32[1]{0}', space=sflag, size = 0x4, scoped, tag = 'scoped memory for tpu_custom_call.1']
    %11 = vsyncpa [#allocation3], 0
    // Predicated region
    $region2: #{tpu_custom_call.1} parent=1 // pred_check
      _
    $region3: #{tpu_custom_call.1} parent=1 // pred_check_branch
      %13 = sbr.rel (0) target = $region5
    $region4: #{tpu_custom_call.1} parent=1 // pred_region
      _
    $region5: #{tpu_custom_call.1} parent=1 // pred_fallthru
      _
    // Predicated region
    $region6: #{tpu_custom_call.1} parent=1 // pred_check
      _
    $region7: #{tpu_custom_call.1} parent=1 // pred_check_branch
      %15 = sbr.rel (0) target = $region9
    $region8: #{tpu_custom_call.1} parent=1 // pred_region
      _
    $region9: #{tpu_custom_call.1} parent=1 // pred_fallthru
      _
    // Predicated region
    $region10: #{tpu_custom_call.1} parent=1 // pred_check
      _
    $region11: #{tpu_custom_call.1} parent=1 // pred_check_branch
      %17 = sbr.rel (0) target = $region13
    $region12: #{tpu_custom_call.1} parent=1 // pred_region
      _
    $region13: #{tpu_custom_call.1} parent=1 // pred_fallthru
      _
    // Predicated region
    $region14: #{tpu_custom_call.1} parent=1 // pred_check
      _
    $region15: #{tpu_custom_call.1} parent=1 // pred_check_branch
      %19 = sbr.rel (0) target = $region17
    $region16: #{tpu_custom_call.1} parent=1 // pred_region
      _
    $region17: #{tpu_custom_call.1} parent=1 // pred_fallthru
      _
    // Predicated region
    $region18: #{tpu_custom_call.1} parent=1 // pred_check
      _
    $region19: #{tpu_custom_call.1} parent=1 // pred_check_branch
      %21 = sbr.rel (0) target = $region21
    $region20: #{tpu_custom_call.1} parent=1 // pred_region
      _
    $region21: #{tpu_custom_call.1} parent=1 // pred_fallthru
      _
    // Predicated region
    $region22: #{tpu_custom_call.1} parent=1 // pred_check
      _
    $region23: #{tpu_custom_call.1} parent=1 // pred_check_branch
      %23 = sbr.rel (0) target = $region25
    $region24: #{tpu_custom_call.1} parent=1 // pred_region
      _
    $region25: #{tpu_custom_call.1} parent=1 // pred_fallthru
      _
    %v25 = vld [vmem:[%s0] sm:$0xf]
    %v26 = vld [vmem:[%s0 + $0x4] sm:$0xf]
    %v27 = vld [vmem:[%s0 + $0x8] sm:$0xf]
    %v28 = vld [vmem:[%s0 + $0xc] sm:$0xf]
    %v29 = vld [vmem:[%s0 + $0x10] sm:$0xf]
    %v30 = vld [vmem:[%s0 + $0x14] sm:$0xf]
    %v31 = vld [vmem:[%s0 + $0x18] sm:$0xf]
    %v32 = vld [vmem:[%s0 + $0x1c] sm:$0xf]
    %v33 = vld [vmem:[%s1] sm:$0xf]
    %v34 = vld [vmem:[%s1 + $0x4] sm:$0xf]
    %v35 = vld [vmem:[%s1 + $0x8] sm:$0xf]
    %v36 = vld [vmem:[%s1 + $0xc] sm:$0xf]
    %v37 = vld [vmem:[%s2] sm:$0x1]
    %v39 = vperm.slane %v37, 0
    %v49 = vunpack.c.l.b16 %v25
    %v50 = vunpack.c.l.b16 %v26
    %v51 = vunpack.c.l.b16 %v27
    %v52 = vunpack.c.l.b16 %v28
    %v53 = vunpack.c.l.b16 %v29
    %v54 = vunpack.c.l.b16 %v30
    %v55 = vunpack.c.l.b16 %v31
    %v56 = vunpack.c.l.b16 %v32
    %v57 = vpack.c.b16 %v50, %v49
    %v58 = vpack.c.b16 %v52, %v51
    %v59 = vpack.c.b16 %v54, %v53
    %v60 = vpack.c.b16 %v56, %v55
    %v65 = vunpack.c.l.b16 %v33
    %v66 = vunpack.c.l.b16 %v34
    %v67 = vunpack.c.l.b16 %v35
    %v68 = vunpack.c.l.b16 %v36
    %v69 = vpack.c.b16 %v66, %v65
    %v70 = vpack.c.b16 %v68, %v67
    %vm73 = vcmask 261120
    %v75 = vsel %vm73, %v57, 0
    %v78 = vsel %vm73, %v58, 0
    %v81 = vsel %vm73, %v59, 0
    %v84 = vsel %vm73, %v60, 0
    %86 = vmatpush.bf16.msra.mxu0 0
    %87 = vmatpush.bf16.msra.mxu0 0
    %88 = vmatpush.bf16.msra.mxu0 0
    %89 = vmatpush.bf16.msra.mxu0 0
    %90 = vmatpush.bf16.msra.mxu0 0
    %91 = vmatpush.bf16.msra.mxu0 0
    %92 = vmatpush.bf16.msra.mxu0 %v70
    %93 = vmatpush.bf16.msra.mxu0 %v69
    %94 = vmatmul.bf16.gmra.mxu0 %v75
    %v95 = vpop.f32.mrf.mxu0
    %v96 = vadd.f32 %v39, %v95
    %v97 = vpop.f32.mrf.mxu0
    %v98 = vadd.f32 %v39, %v97
    %99 = vmatmul.bf16.gmra.mxu0 %v78
    %v100 = vpop.f32.mrf.mxu0
    %v101 = vadd.f32 %v39, %v100
    %v102 = vpop.f32.mrf.mxu0
    %v103 = vadd.f32 %v39, %v102
    %104 = vmatmul.bf16.gmra.mxu0 %v81
    %v105 = vpop.f32.mrf.mxu0
    %v106 = vadd.f32 %v39, %v105
    %v107 = vpop.f32.mrf.mxu0
    %v108 = vadd.f32 %v39, %v107
    %109 = vmatmul.bf16.gmra.mxu0 %v84
    %v110 = vpop.f32.mrf.mxu0
    %v111 = vadd.f32 %v39, %v110
    %v112 = vpop.f32.mrf.mxu0
    %v113 = vadd.f32 %v39, %v112
    %114 = vdwg.mxu0
    %v115 = vmul.f32 %v96, 0.5
    %v116 = vmul.f32 %v98, 0.5
    %v117 = vmul.f32 %v101, 0.5
    %v118 = vmul.f32 %v103, 0.5
    %v119 = vmul.f32 %v106, 0.5
    %v120 = vmul.f32 %v108, 0.5
    %v121 = vmul.f32 %v111, 0.5
    %v122 = vmul.f32 %v113, 0.5
    %v123 = vmul.f32 %v96, 0.044715
    %v124 = vmul.f32 %v98, 0.044715
    %v125 = vmul.f32 %v101, 0.044715
    %v126 = vmul.f32 %v103, 0.044715
    %v127 = vmul.f32 %v106, 0.044715
    %v128 = vmul.f32 %v108, 0.044715
    %v129 = vmul.f32 %v111, 0.044715
    %v130 = vmul.f32 %v113, 0.044715
    %v131 = vmul.f32 %v123, %v96
    %v132 = vmul.f32 %v124, %v98
    %v133 = vmul.f32 %v125, %v101
    %v134 = vmul.f32 %v126, %v103
    %v135 = vmul.f32 %v127, %v106
    %v136 = vmul.f32 %v128, %v108
    %v137 = vmul.f32 %v129, %v111
    %v138 = vmul.f32 %v130, %v113
    %v139 = vmul.f32 %v131, %v96
    %v140 = vmul.f32 %v132, %v98
    %v141 = vmul.f32 %v133, %v101
    %v142 = vmul.f32 %v134, %v103
    %v143 = vmul.f32 %v135, %v106
    %v144 = vmul.f32 %v136, %v108
    %v145 = vmul.f32 %v137, %v111
    %v146 = vmul.f32 %v138, %v113
    %v147 = vadd.f32 %v96, %v139
    %v148 = vadd.f32 %v98, %v140
    %v149 = vadd.f32 %v101, %v141
    %v150 = vadd.f32 %v103, %v142
    %v151 = vadd.f32 %v106, %v143
    %v152 = vadd.f32 %v108, %v144
    %v153 = vadd.f32 %v111, %v145
    %v154 = vadd.f32 %v113, %v146
    %v155 = vmul.f32 %v147, 0.7978846
    %v156 = vmul.f32 %v148, 0.7978846
    %v157 = vmul.f32 %v149, 0.7978846
    %v158 = vmul.f32 %v150, 0.7978846
    %v159 = vmul.f32 %v151, 0.7978846
    %v160 = vmul.f32 %v152, 0.7978846
    %v161 = vmul.f32 %v153, 0.7978846
    %v162 = vmul.f32 %v154, 0.7978846
    %v163 = vtanh.pop %v155
    %v164 = vtanh.pop %v156
    %v165 = vtanh.pop %v157
    %v166 = vtanh.pop %v158
    %v167 = vtanh.pop %v159
    %v168 = vtanh.pop %v160
    %v169 = vtanh.pop %v161
    %v170 = vtanh.pop %v162
    %v171 = vadd.f32 %v163, 1.0
    %v172 = vadd.f32 %v164, 1.0
    %v173 = vadd.f32 %v165, 1.0
    %v174 = vadd.f32 %v166, 1.0
    %v175 = vadd.f32 %v167, 1.0
    %v176 = vadd.f32 %v168, 1.0
    %v177 = vadd.f32 %v169, 1.0
    %v178 = vadd.f32 %v170, 1.0
    %v179 = vmul.f32 %v115, %v171
    %v180 = vmul.f32 %v116, %v172
    %v181 = vmul.f32 %v117, %v173
    %v182 = vmul.f32 %v118, %v174
    %v183 = vmul.f32 %v119, %v175
    %v184 = vmul.f32 %v120, %v176
    %v185 = vmul.f32 %v121, %v177
    %v186 = vmul.f32 %v122, %v178
    %v187 = vpack.c.bf16 %v180, %v179
    %v188 = vpack.c.bf16 %v182, %v181
    %v189 = vpack.c.bf16 %v184, %v183
    %v190 = vpack.c.bf16 %v186, %v185
    %v191 = vld [vmem:[%s3] sm:$0xf]
    %v192 = vld [vmem:[%s3 + $0x4] sm:$0xf]
    %v193 = vld [vmem:[%s3 + $0x8] sm:$0xf]
    %v194 = vld [vmem:[%s3 + $0xc] sm:$0xf]
    %v195 = vld [vmem:[%s4] sm:$0x1]
    %v197 = vperm.slane %v195, 0
    %v203 = vunpack.c.l.b16 %v191
    %v204 = vunpack.c.l.b16 %v192
    %v205 = vunpack.c.l.b16 %v193
    %v206 = vunpack.c.l.b16 %v194
    %v207 = vpack.c.b16 %v204, %v203
    %v208 = vpack.c.b16 %v206, %v205
    %v212 = vsel %vm73, %v187, 0
    %v215 = vsel %vm73, %v188, 0
    %v218 = vsel %vm73, %v189, 0
    %v221 = vsel %vm73, %v190, 0
    %223 = vmatpush.bf16.msra.mxu0 0
    %224 = vmatpush.bf16.msra.mxu0 0
    %225 = vmatpush.bf16.msra.mxu0 0
    %226 = vmatpush.bf16.msra.mxu0 0
    %227 = vmatpush.bf16.msra.mxu0 0
    %228 = vmatpush.bf16.msra.mxu0 0
    %229 = vmatpush.bf16.msra.mxu0 %v208
    %230 = vmatpush.bf16.msra.mxu0 %v207
    %231 = vmatmul.bf16.gmra.mxu0 %v212
    %v232 = vpop.f32.mrf.mxu0
    %v233 = vadd.f32 %v197, %v232
    %v234 = vpop.f32.mrf.mxu0
    %v235 = vadd.f32 %v197, %v234
    %236 = vmatmul.bf16.gmra.mxu0 %v215
    %v237 = vpop.f32.mrf.mxu0
    %v238 = vadd.f32 %v197, %v237
    %v239 = vpop.f32.mrf.mxu0
    %v240 = vadd.f32 %v197, %v239
    %241 = vmatmul.bf16.gmra.mxu0 %v218
    %v242 = vpop.f32.mrf.mxu0
    %v243 = vadd.f32 %v197, %v242
    %v244 = vpop.f32.mrf.mxu0
    %v245 = vadd.f32 %v197, %v244
    %246 = vmatmul.bf16.gmra.mxu0 %v221
    %v247 = vpop.f32.mrf.mxu0
    %v248 = vadd.f32 %v197, %v247
    %v249 = vpop.f32.mrf.mxu0
    %v250 = vadd.f32 %v197, %v249
    %251 = vdwg.mxu0
    %v252 = vld [vmem:[%s5] sm:$0xff]
    %v253 = vld [vmem:[%s5 + $0x8] sm:$0xff]
    %v254 = vld [vmem:[%s5 + $0x10] sm:$0xff]
    %v255 = vld [vmem:[%s5 + $0x18] sm:$0xff]
    %v256 = vld [vmem:[%s5 + $0x20] sm:$0xff]
    %v257 = vld [vmem:[%s5 + $0x28] sm:$0xff]
    %v258 = vld [vmem:[%s5 + $0x30] sm:$0xff]
    %v259 = vld [vmem:[%s5 + $0x38] sm:$0xff]
    %v260 = vmul.f32 %v233, %v252
    %v261 = vmul.f32 %v235, %v253
    %v262 = vmul.f32 %v238, %v254
    %v263 = vmul.f32 %v240, %v255
    %v264 = vmul.f32 %v243, %v256
    %v265 = vmul.f32 %v245, %v257
    %v266 = vmul.f32 %v248, %v258
    %v267 = vmul.f32 %v250, %v259
    %vm268 = vcmask 31744
    %v269 = vsel %vm268, %v260, 0.0
    %270 = vadd.xlane.f32.xlu0 %v269
    %v271 = vpop.xlane.xlu0 %270
    %v272 = vsel %vm268, %v261, 0.0
    %273 = vadd.xlane.f32.xlu0 %v272
    %v274 = vpop.xlane.xlu0 %273
    %v275 = vsel %vm268, %v262, 0.0
    %276 = vadd.xlane.f32.xlu0 %v275
    %v277 = vpop.xlane.xlu0 %276
    %v278 = vsel %vm268, %v263, 0.0
    %279 = vadd.xlane.f32.xlu0 %v278
    %v280 = vpop.xlane.xlu0 %279
    %v281 = vsel %vm268, %v264, 0.0
    %282 = vadd.xlane.f32.xlu0 %v281
    %v283 = vpop.xlane.xlu0 %282
    %v284 = vsel %vm268, %v265, 0.0
    %285 = vadd.xlane.f32.xlu0 %v284
    %v286 = vpop.xlane.xlu0 %285
    %v287 = vsel %vm268, %v266, 0.0
    %288 = vadd.xlane.f32.xlu0 %v287
    %v289 = vpop.xlane.xlu0 %288
    %v290 = vsel %vm268, %v267, 0.0
    %291 = vadd.xlane.f32.xlu0 %v290
    %v292 = vpop.xlane.xlu0 %291
    %v301 = vlaneseq
    %v302 = vand.u32 %v301, 127
    %v303 = vperm.slane %v271, %v302
    %v304 = vadd.s32 %v302, 4294967288
    %v305 = vperm.slane %v274, %v304
    %vm306 = vcmask 130112
    %v307 = vsel %vm306, %v305, %v303
    %v308 = vadd.s32 %v302, 4294967280
    %v309 = vperm.slane %v277, %v308
    %vm310 = vcmask 195712
    %v311 = vsel %vm310, %v309, %v307
    %v312 = vadd.s32 %v302, 4294967272
    %v313 = vperm.slane %v280, %v312
    %vm314 = vcmask 261312
    %v315 = vsel %vm314, %v313, %v311
    %v316 = vadd.s32 %v302, 4294967264
    %v317 = vperm.slane %v283, %v316
    %vm318 = vcmask 326912
    %v319 = vsel %vm318, %v317, %v315
    %v320 = vadd.s32 %v302, 4294967256
    %v321 = vperm.slane %v286, %v320
    %vm322 = vcmask 392512
    %v323 = vsel %vm322, %v321, %v319
    %v324 = vadd.s32 %v302, 4294967248
    %v325 = vperm.slane %v289, %v324
    %vm326 = vcmask 458112
    %v327 = vsel %vm326, %v325, %v323
    %v328 = vadd.s32 %v302, 4294967240
    %v329 = vperm.slane %v292, %v328
    %vm330 = vcmask 523712
    %v331 = vsel %vm330, %v329, %v327
    %vm333 = vcmask 516096
    %334 = vst.msk [vmem:[#allocation2] sm:$0x1] %vm333, %v331
    // Predicated region
    $region26: #{tpu_custom_call.1} parent=1 // pred_check
      _
    $region27: #{tpu_custom_call.1} parent=1 // pred_check_branch
      %336 = sbr.rel (0) target = $region29
    $region28: #{tpu_custom_call.1} parent=1 // pred_region
      %338 = vsyncadd [#allocation3], 0
      %s340 = sshll.u32 [#allocation2], 4
      %s341 = int_to_ptr.vmem [resolvable:$true] %s340
      %s342 = sshll.u32 %s6, 4
      %s343 = int_to_ptr.hbm [resolvable:$true] %s342
      %345 = dma.vmem_to_hbm [thread:$0]  %s341, 16, %s343, [#allocation3]
    $region29: #{tpu_custom_call.1} parent=1 // pred_fallthru
      _
    // Predicated region
    $region30: #{tpu_custom_call.1} parent=1 // pred_check
      _
    $region31: #{tpu_custom_call.1} parent=1 // pred_check_branch
      %347 = sbr.rel (0) target = $region33
    $region32: #{tpu_custom_call.1} parent=1 // pred_region
      %349 = dma.done [#allocation3], 16
    $region33: #{tpu_custom_call.1} parent=1 // pred_fallthru
      _
    %350 = vsyncpa [#allocation3], 1

</llo_original>
